<compile_context>
chip_gen: v7x
topology: tpu7x:2x2x1
jax: 0.10.0
libtpu: 0.0.40
codegen_flags: <defaults>
</compile_context>

<pallas_src>
import functools
import math

import jax
import jax.numpy as jnp
from jax.experimental import pallas as pl
from jax.experimental.pallas import tpu as pltpu

# ----------------------- demo dimensions (small, module-consistent) ----------
B = 2              # batch
P = 4              # patch grid -> P*P patch tokens (+1 CLS token)
P2 = P * P
D_IMG = 32         # image_feature_dim
S = 8              # text sequence length
D_TXT = 32         # bert_embedding_dim
E = 512            # embed_dim of BiCrossAttentionLayer (fixed by the module)
H = 4              # num_heads (fixed by the module)
DH = E // H        # head dim = 128 -> exactly one lane tile
C = 128            # combined_dim (multiple of 128 -> lane dense)
NUM_LABELS = 4
LN_EPS = 1e-5
GEM_EPS = 1e-6

_VMEM = pl.BlockSpec(memory_space=pltpu.MemorySpace.VMEM)
_SMEM = pl.BlockSpec(memory_space=pltpu.MemorySpace.SMEM)


# ============================== kernels ======================================
def _gem_pool_kernel(p_ref, x_ref, o_ref):
    """GeM pooling for one batch element: (1, P2, D) -> (1, 1, D)."""
    p = p_ref[0]
    x = jnp.maximum(x_ref[0], GEM_EPS)                  # (P2, D), strictly > 0
    xp = jnp.exp(p * jnp.log(x))                        # x ** p  (p may be non-integer)
    m = jnp.mean(xp, axis=0, keepdims=True)             # (1, D)  mean over spatial tokens
    o_ref[0] = jnp.exp(jnp.log(m) / p).astype(o_ref.dtype)   # m ** (1/p)


def _linear_kernel(x_ref, w_ref, b_ref, o_ref):
    """Y = X @ W + b, f32 accumulation on the MXU."""
    o_ref[...] = (
        jnp.dot(x_ref[...], w_ref[...], preferred_element_type=jnp.float32)
        + b_ref[...]
    ).astype(o_ref.dtype)


def _sdpa_kernel(q_ref, k_ref, v_ref, o_ref, *, scale):
    """Scaled-dot-product attention for one (batch, head) pair."""
    q = q_ref[0]                                         # (Lq, DH)
    k = k_ref[0]                                         # (Lk, DH)
    v = v_ref[0]                                         # (Lk, DH)
    s = jax.lax.dot_general(
        q, k, (((1,), (1,)), ((), ())),
        preferred_element_type=jnp.float32) * scale      # (Lq, Lk)
    m = jnp.max(s, axis=-1, keepdims=True)
    p = jnp.exp(s - m)
    l = jnp.sum(p, axis=-1, keepdims=True)
    p = p * pl.reciprocal(l, approx=False)
    o = jnp.dot(p, v, preferred_element_type=jnp.float32)   # (Lq, DH)
    o_ref[0] = o.astype(o_ref.dtype)


def _add_layernorm_kernel(x_ref, y_ref, g_ref, b_ref, o_ref):
    """LayerNorm(x + y) over the last (lane) axis."""
    z = x_ref[...] + y_ref[...]
    mu = jnp.mean(z, axis=-1, keepdims=True)
    zc = z - mu
    var = jnp.mean(zc * zc, axis=-1, keepdims=True)
    o_ref[...] = (zc * jax.lax.rsqrt(var + LN_EPS) * g_ref[...] + b_ref[...]
                  ).astype(o_ref.dtype)


def _head_kernel(img_ref, txt_ref,
                 w1i_ref, w1t_ref, b1_ref, g1_ref, be1_ref,
                 w2_ref, b2_ref, g2_ref, be2_ref,
                 w3_ref, b3_ref, o_ref):
    """Fused classification head: text mean, implicit concat, fc1/fc2/fc3."""
    img = img_ref[...]                                   # (B, E)
    txt = txt_ref[...]                                   # (B*S, E)
    b, e = img.shape
    bs = txt.shape[0]
    s = bs // b

    # per-batch mean over text tokens via an averaging matmul (stays on MXU)
    row = jax.lax.broadcasted_iota(jnp.int32, (b, bs), 0)
    col = jax.lax.broadcasted_iota(jnp.int32, (b, bs), 1)
    avg = jnp.where((col // s) == row, 1.0 / s, 0.0).astype(jnp.float32)
    txt_mean = jnp.dot(avg, txt, preferred_element_type=jnp.float32)   # (B, E)

    def ln(x, g, bias):
        mu = jnp.mean(x, axis=-1, keepdims=True)
        xc = x - mu
        var = jnp.mean(xc * xc, axis=-1, keepdims=True)
        return xc * jax.lax.rsqrt(var + LN_EPS) * g + bias

    # fc1 on the (implicitly concatenated) [img | txt_mean] features
    h1 = (jnp.dot(img, w1i_ref[...], preferred_element_type=jnp.float32)
          + jnp.dot(txt_mean, w1t_ref[...], preferred_element_type=jnp.float32)
          + b1_ref[...])
    r = jnp.maximum(ln(h1, g1_ref[...], be1_ref[...]), 0.0)             # fc1 + LN + ReLU

    h2 = ln(jnp.dot(r, w2_ref[...], preferred_element_type=jnp.float32)
            + b2_ref[...], g2_ref[...], be2_ref[...])                   # fc2 + LN
    h = jnp.maximum(h2 + r, 0.0)                                        # residual + ReLU

    o_ref[...] = (jnp.dot(h, w3_ref[...], preferred_element_type=jnp.float32)
                  + b3_ref[...]).astype(o_ref.dtype)


# ============================ pallas_call wrappers ===========================
def pallas_gem_pool(x_tokens, p_scalar):
    b, p2, d = x_tokens.shape
    out = pl.pallas_call(
        _gem_pool_kernel,
        out_shape=jax.ShapeDtypeStruct((b, 1, d), jnp.float32),
        grid=(b,),
        in_specs=[
            _SMEM,                                            # p (1,)
            pl.BlockSpec((1, p2, d), lambda i: (i, 0, 0)),    # patch tokens
        ],
        out_specs=pl.BlockSpec((1, 1, d), lambda i: (i, 0, 0)),
        compiler_params=pltpu.CompilerParams(dimension_semantics=("parallel",)),
    )(jnp.reshape(p_scalar, (1,)).astype(jnp.float32), x_tokens)
    return out[:, 0, :]                                       # (B, D)


def pallas_linear(x, w, b):
    m, _ = x.shape
    n = w.shape[1]
    return pl.pallas_call(
        _linear_kernel,
        out_shape=jax.ShapeDtypeStruct((m, n), jnp.float32),
        in_specs=[_VMEM, _VMEM, _VMEM],
        out_specs=_VMEM,
    )(x, w, b.reshape(1, n))


def pallas_sdpa(q_h, k_h, v_h, scale):
    bh, lq, dh = q_h.shape
    lk = k_h.shape[1]
    kernel = functools.partial(_sdpa_kernel, scale=scale)
    return pl.pallas_call(
        kernel,
        out_shape=jax.ShapeDtypeStruct((bh, lq, dh), jnp.float32),
        grid=(bh,),
        in_specs=[
            pl.BlockSpec((1, lq, dh), lambda i: (i, 0, 0)),
            pl.BlockSpec((1, lk, dh), lambda i: (i, 0, 0)),
            pl.BlockSpec((1, lk, dh), lambda i: (i, 0, 0)),
        ],
        out_specs=pl.BlockSpec((1, lq, dh), lambda i: (i, 0, 0)),
        compiler_params=pltpu.CompilerParams(dimension_semantics=("parallel",)),
    )(q_h, k_h, v_h)


def pallas_add_layernorm(x, y, gamma, beta):
    m, e = x.shape
    return pl.pallas_call(
        _add_layernorm_kernel,
        out_shape=jax.ShapeDtypeStruct((m, e), jnp.float32),
        in_specs=[_VMEM, _VMEM, _VMEM, _VMEM],
        out_specs=_VMEM,
    )(x, y, gamma.reshape(1, e), beta.reshape(1, e))


def pallas_head(img_vec, txt_tokens, hp):
    b, _ = img_vec.shape
    c = hp["w1_img"].shape[1]
    nl = hp["w3"].shape[1]
    txt2d = txt_tokens.reshape(-1, txt_tokens.shape[-1])
    return pl.pallas_call(
        _head_kernel,
        out_shape=jax.ShapeDtypeStruct((b, nl), jnp.float32),
        in_specs=[_VMEM] * 13,
        out_specs=_VMEM,
    )(img_vec, txt2d,
      hp["w1_img"], hp["w1_txt"], hp["b1"].reshape(1, c),
      hp["g1"].reshape(1, c), hp["be1"].reshape(1, c),
      hp["w2"], hp["b2"].reshape(1, c),
      hp["g2"].reshape(1, c), hp["be2"].reshape(1, c),
      hp["w3"], hp["b3"].reshape(1, nl))


# ============================ composite forward ==============================
def multihead_attention(q, k, v, ap):
    """nn.MultiheadAttention forward (batch_first, eval mode)."""
    b, lq, e = q.shape
    lk = k.shape[1]
    qp = pallas_linear(q.reshape(b * lq, e), ap["wq"], ap["bq"])
    kp = pallas_linear(k.reshape(b * lk, e), ap["wk"], ap["bk"])
    vp = pallas_linear(v.reshape(b * lk, e), ap["wv"], ap["bv"])

    def split_heads(x, l):
        return x.reshape(b, l, H, DH).transpose(0, 2, 1, 3).reshape(b * H, l, DH)

    oh = pallas_sdpa(split_heads(qp, lq), split_heads(kp, lk), split_heads(vp, lk),
                     1.0 / math.sqrt(DH))
    o = oh.reshape(b, H, lq, DH).transpose(0, 2, 1, 3).reshape(b * lq, e)
    o = pallas_linear(o, ap["wo"], ap["bo"])
    return o.reshape(b, lq, e)


def bi_cross_attention(x1, x2, p):
    b, l1, d1 = x1.shape
    l2, d2 = x2.shape[1], x2.shape[2]

    q12 = pallas_linear(x1.reshape(b * l1, d1), p["wq12"], p["bq12"]).reshape(b, l1, E)
    k12 = pallas_linear(x2.reshape(b * l2, d2), p["wk12"], p["bk12"]).reshape(b, l2, E)
    v12 = pallas_linear(x2.reshape(b * l2, d2), p["wv12"], p["bv12"]).reshape(b, l2, E)
    a12 = multihead_attention(q12, k12, v12, p["attn12"])          # dropout: identity (eval)
    ux1 = pallas_add_layernorm(q12.reshape(b * l1, E), a12.reshape(b * l1, E),
                               p["ln12_g"], p["ln12_b"]).reshape(b, l1, E)

    q21 = pallas_linear(x2.reshape(b * l2, d2), p["wq21"], p["bq21"]).reshape(b, l2, E)
    k21 = pallas_linear(ux1.reshape(b * l1, E), p["wk21"], p["bk21"]).reshape(b, l1, E)
    v21 = pallas_linear(ux1.reshape(b * l1, E), p["wv21"], p["bv21"]).reshape(b, l1, E)
    a21 = multihead_attention(q21, k21, v21, p["attn21"])          # dropout: identity (eval)
    ux2 = pallas_add_layernorm(q21.reshape(b * l2, E), a21.reshape(b * l2, E),
                               p["ln21_g"], p["ln21_b"]).reshape(b, l2, E)
    return ux1, ux2


def combined_models_bi_forward(image_hidden, bert_hidden, params):
    """CombinedModelsBi.forward given backbone hidden states (eval mode)."""
    patch_tokens = image_hidden[:, 1:, :]                          # drop CLS
    pooled = pallas_gem_pool(patch_tokens.astype(jnp.float32), params["gem_p"])
    image_features = pooled[:, None, :]                            # (B, 1, D_IMG)

    ux1, ux2 = bi_cross_attention(image_features, bert_hidden.astype(jnp.float32), params)

    image_vector = ux1[:, 0, :]                                    # (B, E)
    logits = pallas_head(image_vector, ux2, params["head"])        # mean/concat/fc1..fc3 fused
    return logits


# ============================ pure-JAX reference =============================
def _mm(a, b):
    return jax.lax.dot_general(a, b, (((a.ndim - 1,), (0,)), ((), ())),
                               precision=jax.lax.Precision.HIGHEST)


def _reference(image_hidden, bert_hidden, params):
    def ln(x, g, b):
        mu = x.mean(-1, keepdims=True)
        var = ((x - mu) ** 2).mean(-1, keepdims=True)
        return (x - mu) / jnp.sqrt(var + LN_EPS) * g + b

    def mha_ref(q, k, v, ap):
        b, lq, _ = q.shape
        lk = k.shape[1]
        qp = (_mm(q, ap["wq"]) + ap["bq"]).reshape(b, lq, H, DH).transpose(0, 2, 1, 3)
        kp = (_mm(k, ap["wk"]) + ap["bk"]).reshape(b, lk, H, DH).transpose(0, 2, 1, 3)
        vp = (_mm(v, ap["wv"]) + ap["bv"]).reshape(b, lk, H, DH).transpose(0, 2, 1, 3)
        s = jnp.einsum("bhqd,bhkd->bhqk", qp, kp,
                       precision=jax.lax.Precision.HIGHEST) / math.sqrt(DH)
        a = jax.nn.softmax(s, axis=-1)
        o = jnp.einsum("bhqk,bhkd->bhqd", a, vp,
                       precision=jax.lax.Precision.HIGHEST)
        o = o.transpose(0, 2, 1, 3).reshape(b, lq, E)
        return _mm(o, ap["wo"]) + ap["bo"]

    x = image_hidden[:, 1:, :].astype(jnp.float32)
    pg = params["gem_p"]
    pooled = jnp.mean(jnp.maximum(x, GEM_EPS) ** pg, axis=1) ** (1.0 / pg)
    x1 = pooled[:, None, :]
    x2 = bert_hidden.astype(jnp.float32)

    q12 = _mm(x1, params["wq12"]) + params["bq12"]
    k12 = _mm(x2, params["wk12"]) + params["bk12"]
    v12 = _mm(x2, params["wv12"]) + params["bv12"]
    ux1 = ln(q12 + mha_ref(q12, k12, v12, params["attn12"]),
             params["ln12_g"], params["ln12_b"])

    q21 = _mm(x2, params["wq21"]) + params["bq21"]
    k21 = _mm(ux1, params["wk21"]) + params["bk21"]
    v21 = _mm(ux1, params["wv21"]) + params["bv21"]
    ux2 = ln(q21 + mha_ref(q21, k21, v21, params["attn21"]),
             params["ln21_g"], params["ln21_b"])

    img_vec = ux1[:, 0, :]
    txt_vec = ux2.mean(axis=1)
    comb = jnp.concatenate([img_vec, txt_vec], axis=1)
    hp = params["head"]
    w1 = jnp.concatenate([hp["w1_img"], hp["w1_txt"]], axis=0)
    h1 = jax.nn.relu(ln(_mm(comb, w1) + hp["b1"], hp["g1"], hp["be1"]))
    h2 = ln(_mm(h1, hp["w2"]) + hp["b2"], hp["g2"], hp["be2"])
    h = jax.nn.relu(h2 + h1)
    return _mm(h, hp["w3"]) + hp["b3"]


# ================================ init & main ================================
def init_params(key):
    keys = iter(jax.random.split(key, 64))

    def w(shape, scale=0.02):
        return scale * jax.random.normal(next(keys), shape, dtype=jnp.float32)

    def bias(shape, scale=0.01):
        return scale * jax.random.normal(next(keys), shape, dtype=jnp.float32)

    def attn_params():
        return dict(wq=w((E, E)), bq=bias((E,)), wk=w((E, E)), bk=bias((E,)),
                    wv=w((E, E)), bv=bias((E,)), wo=w((E, E)), bo=bias((E,)))

    return dict(
        gem_p=jnp.float32(3.0),
        wq12=w((D_IMG, E)), bq12=bias((E,)),
        wk12=w((D_TXT, E)), bk12=bias((E,)),
        wv12=w((D_TXT, E)), bv12=bias((E,)),
        attn12=attn_params(),
        ln12_g=jnp.ones((E,), jnp.float32), ln12_b=jnp.zeros((E,), jnp.float32),
        wq21=w((D_TXT, E)), bq21=bias((E,)),
        wk21=w((E, E)), bk21=bias((E,)),
        wv21=w((E, E)), bv21=bias((E,)),
        attn21=attn_params(),
        ln21_g=jnp.ones((E,), jnp.float32), ln21_b=jnp.zeros((E,), jnp.float32),
        head=dict(
            w1_img=w((E, C)), w1_txt=w((E, C)), b1=bias((C,)),
            g1=jnp.ones((C,), jnp.float32), be1=jnp.zeros((C,), jnp.float32),
            w2=w((C, C)), b2=bias((C,)),
            g2=jnp.ones((C,), jnp.float32), be2=jnp.zeros((C,), jnp.float32),
            w3=w((C, NUM_LABELS)), b3=bias((NUM_LABELS,)),
        ),
    )


if __name__ == "__main__":
    key = jax.random.PRNGKey(0)
    k_img, k_txt, k_par = jax.random.split(key, 3)

    # backbone hidden states (deterministic stand-ins for ViT / BERT outputs)
    image_hidden = jax.random.uniform(k_img, (B, 1 + P2, D_IMG),
                                      dtype=jnp.float32, minval=0.05, maxval=1.0)
    bert_hidden = jax.random.normal(k_txt, (B, S, D_TXT), dtype=jnp.float32)

    params = init_params(k_par)

    logits = combined_models_bi_forward(image_hidden, bert_hidden, params)
    logits = jax.block_until_ready(logits)

    ref = _reference(image_hidden, bert_hidden, params)
    assert logits.shape == (B, NUM_LABELS)
    assert jnp.allclose(logits, ref, rtol=1e-3, atol=1e-3), (logits, ref)

    print("KERNEL_OK")
</pallas_src>

<mosaic_0001>
module attributes {stable_mosaic.version = 11 : i64} {
  func.func @_gem_pool_kernel(%arg0: i32, %arg1: memref<1xf32, #tpu.memory_space<smem>>, %arg2: memref<1x16x32xf32, #tpu.memory_space<vmem>>, %arg3: memref<1x1x32xf32, #tpu.memory_space<vmem>>) attributes {dimension_semantics = [#tpu.dimension_semantics<parallel>], iteration_bounds = array<i64: 2>, scalar_prefetch = 0 : i64, scratch_operands = 0 : i64, tpu.core_type = #tpu.core_type<tc>, window_params = [{transform_indices = @transform_0, window_bounds = array<i64: 1>}, {transform_indices = @transform_1, window_bounds = array<i64: 1, 16, 32>}, {transform_indices = @transform_2, window_bounds = array<i64: 1, 1, 32>}]} {
    %c0 = arith.constant 0 : index
    %0 = memref.load %arg1[%c0] : memref<1xf32, #tpu.memory_space<smem>>
    %c0_0 = arith.constant 0 : index
    %c0_1 = arith.constant 0 : index
    %c0_2 = arith.constant 0 : index
    %1 = vector.load %arg2[%c0_0, %c0_1, %c0_2] : memref<1x16x32xf32, #tpu.memory_space<vmem>>, vector<1x16x32xf32>
    %2 = vector.shape_cast %1 : vector<1x16x32xf32> to vector<16x32xf32>
    %cst = arith.constant 9.99999997E-7 : f32
    %3 = vector.broadcast %cst : f32 to vector<16x32xf32>
    %4 = arith.maximumf %2, %3 : vector<16x32xf32>
    %5 = math.log %4 : vector<16x32xf32>
    %6 = vector.broadcast %0 : f32 to vector<16x32xf32>
    %7 = arith.mulf %6, %5 : vector<16x32xf32>
    %8 = math.exp %7 : vector<16x32xf32>
    %cst_3 = arith.constant dense<0.000000e+00> : vector<32xf32>
    %9 = vector.multi_reduction <add>, %8, %cst_3 [0] : vector<16x32xf32> to vector<32xf32>
    %10 = vector.shape_cast %9 : vector<32xf32> to vector<1x32xf32>
    %cst_4 = arith.constant 1.600000e+01 : f32
    %11 = vector.broadcast %cst_4 : f32 to vector<1x32xf32>
    %12 = arith.divf %10, %11 : vector<1x32xf32>
    %13 = math.log %12 : vector<1x32xf32>
    %14 = vector.broadcast %0 : f32 to vector<1x32xf32>
    %15 = arith.divf %13, %14 : vector<1x32xf32>
    %16 = math.exp %15 : vector<1x32xf32>
    %c0_5 = arith.constant 0 : index
    %c0_6 = arith.constant 0 : index
    %c0_7 = arith.constant 0 : index
    %17 = vector.load %arg3[%c0_5, %c0_6, %c0_7] : memref<1x1x32xf32, #tpu.memory_space<vmem>>, vector<1x1x32xf32>
    %18 = vector.shape_cast %17 : vector<1x1x32xf32> to vector<1x32xf32>
    %19 = vector.shape_cast %16 : vector<1x32xf32> to vector<1x1x32xf32>
    tpu.vector_store %arg3[%c0_5, %c0_6, %c0_7], %19 {strides = array<i32>} : memref<1x1x32xf32, #tpu.memory_space<vmem>>, vector<1x1x32xf32>,
    return
  }
  func.func @transform_0(%arg0: i32) -> i32 {
    %c0_i32 = arith.constant 0 : i32
    %c0_i32_0 = arith.constant 0 : i32
    return %c0_i32 : i32
  }
  func.func @transform_1(%arg0: i32) -> (i32, i32, i32) {
    %c0_i32 = arith.constant 0 : i32
    %c0_i32_0 = arith.constant 0 : i32
    %c0_i32_1 = arith.constant 0 : i32
    return %arg0, %c0_i32, %c0_i32_0 : i32, i32, i32
  }
  func.func @transform_2(%arg0: i32) -> (i32, i32, i32) {
    %c0_i32 = arith.constant 0 : i32
    %c0_i32_0 = arith.constant 0 : i32
    %c0_i32_1 = arith.constant 0 : i32
    return %arg0, %c0_i32, %c0_i32_0 : i32, i32, i32
  }
}

</mosaic_0001>

<llo_original>
// kernel: tpu_custom_call.1
$region0: #{tpu_custom_call.1}
  #allocation0 [shape = 'u32[]', space=smem, size = 0x4, offset = 0x4, fixed_abs, tag = 'smem constant byte address 0x4 - core index']
  #allocation1 [shape = 'u32[144,128]{1,0:T(1,128)}', space=vmem, size = 0x12000, scoped, tag = 'internal scratch']
  #allocation2 [shape = 'f32[1]{0:T(128)S(6)}', space=smem, size = 0x200, scoped, tag = 'scoped memory for tpu_custom_call.1']
  %s0 = inlined_call_operand.<no memory space> [shape: f32[1], index: 0, kind: input, shape index: {}]
  %s1 = inlined_call_operand.hbm [shape: f32[2,16,32], index: 1, kind: input, shape index: {}]
  %s2 = inlined_call_operand.hbm [shape: f32[2,1,32], index: 2, kind: output, shape index: {}]
  %s3 = sld [smem:[#allocation0]]
  $region45: #{tpu_custom_call.1} parent=0
    _
  %s5 = ssub.s32 1, %s3
  %s6 = scalar_select 0, %s5, %s3
  %7 = sst [smem:[#allocation2]] %s0
  $region1: #{tpu_custom_call.1} parent=0
    #allocation3 [shape = 'u8[16384]{0}', space=vmem, size = 0x4000, scoped, tag = 'input window, operand 1']
    #allocation4 [shape = 's32[2]{0}', space=sflag, size = 0x8, scoped, tag = 'scoped memory for tpu_custom_call.1']
    #allocation5 [shape = 's32[2]{0}', space=sflag, size = 0x8, scoped, tag = 'scoped memory for tpu_custom_call.1']
    #allocation6 [shape = 'u8[1024]{0}', space=vmem, size = 0x400, scoped, tag = 'output window, operand 0']
    %8 = vsyncpa [#allocation4], 0
    %s9 = scalar_lea.sflag [#allocation4], 1
    %10 = vsyncpa %s9, 0
    %11 = vsyncpa [#allocation5], 0
    %s12 = scalar_lea.sflag [#allocation5], 1
    %13 = vsyncpa %s12, 0
    loop: start=0, step=1, limit=4
    $region2: #{tpu_custom_call.1} parent=1 // loop_pre_header
      _
    $region3: #{tpu_custom_call.1} parent=1 // loop_header
      %s15 = sphi 0, %s19
      %p16 = scmp.ge.s32.totalorder %s15, 4
      %s23 = sphi 0, %s23
      %s25 = sphi 0, %s23
      %s26 = sphi 0, %s25
      %s40 = sphi 0, %s26
      %s46 = sphi 0, %s48
      %s49 = sphi 0, %s46
      %s50 = sphi 0, %s49
      %s66 = sphi 0, %s50
      %s72 = sphi 0, %s74
      %s75 = sphi 0, %s72
      %s76 = sphi 0, %s75
      %s92 = sphi 0, %s76
    $region4: #{tpu_custom_call.1} parent=1 // loop_header_branch
      %18 = sbr.rel (%p16) target = $region8
    $region5: #{tpu_custom_call.1} parent=1 // loop_body
      %s20 = ssub.s32 %s15, 1
      %s21 = ssub.s32 %s15, 2
      %s22 = sadd.s32 %s15, 1
      %s24 = sadd.s32 %s23, 1
      %p27 = scmp.eq.s32.totalorder %s15, 1
      %p28 = scmp.ne.s32.totalorder %s23, %s25
      %p29 = scmp.eq.s32.totalorder %s15, 0
      %p30 = por %p28, %p29
      %p31 = scmp.ne.s32.totalorder %s23, %s25
      %p32 = scmp.eq.s32.totalorder %s20, 1
      %p33 = por %p31, %p32
      %p34 = scmp.ne.s32.totalorder %s25, %s26
      %p35 = scmp.eq.s32.totalorder %s20, 0
      %p36 = por %p34, %p35
      %p37 = scmp.ne.s32.totalorder %s25, %s26
      %p38 = scmp.eq.s32.totalorder %s21, 1
      %p39 = por %p37, %p38
      %p41 = scmp.ne.s32.totalorder %s26, %s40
      %p42 = scmp.eq.s32.totalorder %s21, 0
      %p43 = por %p41, %p42
      %s44 = ssub.s32 %s15, %s22
      %p45 = scmp.eq.s32.totalorder %s44, 0
      %s47 = sadd.s32 %s46, 1
      %s48 = scalar_select %p45, %s46, %s47
      %p51 = pneg %p45
      %p52 = scmp.eq.s32.totalorder %s15, 1
      %p53 = por %p51, %p52
      %p54 = scmp.ne.s32.totalorder %s46, %s49
      %p55 = scmp.eq.s32.totalorder %s15, 0
      %p56 = por %p54, %p55
      %p57 = scmp.ne.s32.totalorder %s46, %s49
      %p58 = scmp.eq.s32.totalorder %s20, 1
      %p59 = por %p57, %p58
      %p60 = scmp.ne.s32.totalorder %s49, %s50
      %p61 = scmp.eq.s32.totalorder %s20, 0
      %p62 = por %p60, %p61
      %p63 = scmp.ne.s32.totalorder %s49, %s50
      %p64 = scmp.eq.s32.totalorder %s21, 1
      %p65 = por %p63, %p64
      %p67 = scmp.ne.s32.totalorder %s50, %s66
      %p68 = scmp.eq.s32.totalorder %s21, 0
      %p69 = por %p67, %p68
      %s70 = ssub.s32 %s15, %s22
      %p71 = scmp.eq.s32.totalorder %s70, 0
      %s73 = sadd.s32 %s72, 1
      %s74 = scalar_select %p71, %s72, %s73
      %p77 = pneg %p71
      %p78 = scmp.eq.s32.totalorder %s15, 1
      %p79 = por %p77, %p78
      %p80 = scmp.ne.s32.totalorder %s72, %s75
      %p81 = scmp.eq.s32.totalorder %s15, 0
      %p82 = por %p80, %p81
      %p83 = scmp.ne.s32.totalorder %s72, %s75
      %p84 = scmp.eq.s32.totalorder %s20, 1
      %p85 = por %p83, %p84
      %p86 = scmp.ne.s32.totalorder %s75, %s76
      %p87 = scmp.eq.s32.totalorder %s20, 0
      %p88 = por %p86, %p87
      %p89 = scmp.ne.s32.totalorder %s75, %s76
      %p90 = scmp.eq.s32.totalorder %s21, 1
      %p91 = por %p89, %p90
      %p93 = scmp.ne.s32.totalorder %s76, %s92
      %p94 = scmp.eq.s32.totalorder %s21, 0
      %p95 = por %p93, %p94
      %p96 = scmp.le.s32.totalorder 1, %s15
      %p97 = scmp.lt.s32.totalorder %s15, 3
      %p98 = pnand %p96, %p97
      %p99 = pneg %p98
      // Predicated region
      $region9: #{tpu_custom_call.1} parent=5 // pred_check
        _
      $region10: #{tpu_custom_call.1} parent=5 // pred_check_branch
        %101 = sbr.rel (%p98) target = $region12
      $region11: #{tpu_custom_call.1} parent=5 // pred_region
        %s102 = ssub.s32 %s15, 1
        // Predicated region
        $region13: #{tpu_custom_call.1} parent=11 // pred_check
          %p103 = pneg %p36
        $region14: #{tpu_custom_call.1} parent=11 // pred_check_branch
          %105 = sbr.rel (%p103) target = $region16
        $region15: #{tpu_custom_call.1} parent=11 // pred_region
          _
        $region16: #{tpu_custom_call.1} parent=11 // pred_fallthru
          _
      $region12: #{tpu_custom_call.1} parent=5 // pred_fallthru
        _
      %p106 = scmp.lt.s32.totalorder %s15, 2
      // Predicated region
      $region17: #{tpu_custom_call.1} parent=5 // pred_check
        %p107 = pneg %p106
      $region18: #{tpu_custom_call.1} parent=5 // pred_check_branch
        %109 = sbr.rel (%p107) target = $region20
      $region19: #{tpu_custom_call.1} parent=5 // pred_region
        // Predicated region
        $region21: #{tpu_custom_call.1} parent=19 // pred_check
          %p110 = pneg %p56
        $region22: #{tpu_custom_call.1} parent=19 // pred_check_branch
          %112 = sbr.rel (%p110) target = $region24
        $region23: #{tpu_custom_call.1} parent=19 // pred_region
          %s113 = sand.u32 %s46, 1
          %s114 = scalar_lea.sflag [#allocation4], %s113
          %s115 = sand.u32 %s46, 1
          %s116 = smul.addr %s115, 16
          %s117 = scalar_lea.vmem [#allocation3], %s116
          %s119 = ssub.s32 256, 256
          %120 = vsyncadd %s114, %s119
          %s121 = smul.addr %s15, 2
          %s122 = smul.addr %s121, 128
          %s123 = scalar_lea.hbm %s1, %s122
          %s124 = sshll.u32 %s117, 4
          %s125 = int_to_ptr.vmem [resolvable:$true] %s124
          %130 = dma.hbm_to_vmem [thread:$0]  %s123, 256, %s125, %s114, 128, 128, 8
        $region24: #{tpu_custom_call.1} parent=19 // pred_fallthru
          _
      $region20: #{tpu_custom_call.1} parent=5 // pred_fallthru
        _
      %p131 = scmp.le.s32.totalorder 1, %s15
      %p132 = scmp.lt.s32.totalorder %s15, 3
      %p133 = pnand %p131, %p132
      %p134 = pneg %p133
      // Predicated region
      $region25: #{tpu_custom_call.1} parent=5 // pred_check
        _
      $region26: #{tpu_custom_call.1} parent=5 // pred_check_branch
        %136 = sbr.rel (%p133) target = $region28
      $region27: #{tpu_custom_call.1} parent=5 // pred_region
        %s137 = ssub.s32 %s15, 1
        %s138 = sand.u32 %s49, 1
        %s139 = scalar_lea.sflag [#allocation4], %s138
        %s140 = sand.u32 %s49, 1
        %s141 = smul.addr %s140, 16
        %s142 = scalar_lea.vmem [#allocation3], %s141
        // Predicated region
        $region29: #{tpu_custom_call.1} parent=27 // pred_check
          %p143 = pneg %p62
        $region30: #{tpu_custom_call.1} parent=27 // pred_check_branch
          %145 = sbr.rel (%p143) target = $region32
        $region31: #{tpu_custom_call.1} parent=27 // pred_region
          %146 = dma.done %s139, 256
        $region32: #{tpu_custom_call.1} parent=27 // pred_fallthru
          _
        %p147 = pneg %p36
        %p148 = pneg %p33
        %s149 = sand.u32 %s49, 1
        %s150 = scalar_lea.sflag [#allocation4], %s149
        %s151 = sand.u32 %s49, 1
        %s152 = smul.addr %s151, 16
        %s153 = scalar_lea.vmem [#allocation3], %s152
        %p154 = pneg %p62
        %p155 = pneg %p59
        %p156 = pneg %p88
        %p157 = pneg %p85
        %s158 = sand.u32 %s75, 1
        %s159 = scalar_lea.sflag [#allocation5], %s158
        %s160 = sand.u32 %s75, 1
        %s161 = scalar_lea.vmem [#allocation6], %s160
        %s162 = sld [smem:[#allocation2]]
        %v163 = vld [vmem:[%s142] sm:$0xff]
        %v164 = vld [vmem:[%s142 + $0x8] sm:$0xff]
        %v165 = vmax.f32 %v163, 1e-06
        %v166 = vmax.f32 %v164, 1e-06
        %v167 = vlog2.pop %v165
        %v168 = vmul.f32 %v167, 0.6931472
        %v169 = vlog2.pop %v166
        %v170 = vmul.f32 %v169, 0.6931472
        %v171 = vstv %s162
        %v172 = vmul.f32 %v171, %v168
        %v173 = vmul.f32 %v171, %v170
        %v174 = vmul.f32 %v172, 1.442695
        %v175 = vpow.pop %v174
        %v176 = vmul.f32 %v173, 1.442695
        %v177 = vpow.pop %v176
        %vm178 = vcmask 261120
        %v179 = vsel %vm178, %v175, 0.0
        %v180 = vsel %vm178, %v177, 0.0
        %v181 = vadd.f32 %v179, %v180
        %v182 = vrot.slane %v181, 4
        %v183 = vadd.f32 %v181, %v182
        %v184 = vrot.slane %v183, 2
        %v185 = vadd.f32 %v183, %v184
        %v186 = vrot.slane %v185, 1
        %v187 = vadd.f32 %v185, %v186
        %v188 = vrcp.pop 16.0
        %v189 = vmul.f32 %v187, %v188
        %v190 = vlog2.pop %v189
        %v191 = vmul.f32 %v190, 0.6931472
        %v192 = vrcp.pop %v171
        %v193 = vmul.f32 %v191, %v192
        %v194 = vmul.f32 %v193, 1.442695
        %v195 = vpow.pop %v194
        %vm196 = vcmask 253952
        %197 = vst.msk [vmem:[%s161] sm:$0x1] %vm196, %v195
        %s198 = sand.u32 %s75, 1
        %s199 = scalar_lea.sflag [#allocation5], %s198
        %s200 = sand.u32 %s75, 1
        %s201 = scalar_lea.vmem [#allocation6], %s200
        // Predicated region
        $region33: #{tpu_custom_call.1} parent=27 // pred_check
          %p202 = pneg %p85
        $region34: #{tpu_custom_call.1} parent=27 // pred_check_branch
          %204 = sbr.rel (%p202) target = $region36
        $region35: #{tpu_custom_call.1} parent=27 // pred_region
          %s206 = ssub.s32 16, 16
          %207 = vsyncadd %s199, %s206
          %s208 = smul.addr %s20, 16
          %s209 = scalar_lea.hbm %s2, %s208
          %s211 = sshll.u32 %s201, 4
          %s212 = int_to_ptr.vmem [resolvable:$true] %s211
          %214 = dma.vmem_to_hbm [thread:$0]  %s212, 16, %s209, %s199
        $region36: #{tpu_custom_call.1} parent=27 // pred_fallthru
          _
      $region28: #{tpu_custom_call.1} parent=5 // pred_fallthru
        _
      %p215 = scmp.le.s32.totalorder 2, %s15
      // Predicated region
      $region37: #{tpu_custom_call.1} parent=5 // pred_check
        %p216 = pneg %p215
      $region38: #{tpu_custom_call.1} parent=5 // pred_check_branch
        %218 = sbr.rel (%p216) target = $region40
      $region39: #{tpu_custom_call.1} parent=5 // pred_region
        %s219 = ssub.s32 %s15, 2
        // Predicated region
        $region41: #{tpu_custom_call.1} parent=39 // pred_check
          %p220 = pneg %p91
        $region42: #{tpu_custom_call.1} parent=39 // pred_check_branch
          %222 = sbr.rel (%p220) target = $region44
        $region43: #{tpu_custom_call.1} parent=39 // pred_region
          %s223 = sand.u32 %s76, 1
          %s224 = scalar_lea.sflag [#allocation5], %s223
          %s225 = sand.u32 %s76, 1
          %s226 = scalar_lea.vmem [#allocation6], %s225
          %227 = dma.done %s224, 16
        $region44: #{tpu_custom_call.1} parent=39 // pred_fallthru
          _
      $region40: #{tpu_custom_call.1} parent=5 // pred_fallthru
        _
    $region6: #{tpu_custom_call.1} parent=1 // loop_footer
      %s19 = sadd.s32 1, %s15
    $region7: #{tpu_custom_call.1} parent=1 // loop_footer_branch
      %14 = sbr.rel target = $region3
    $region8: #{tpu_custom_call.1} parent=1 // loop_exit
      _
    %228 = vsyncpa [#allocation4], 1
    %s229 = scalar_lea.sflag [#allocation4], 1
    %230 = vsyncpa %s229, 1
    %231 = vsyncpa [#allocation5], 1
    %s232 = scalar_lea.sflag [#allocation5], 1
    %233 = vsyncpa %s232, 1

</llo_original>
